<compile_context>
chip_gen: v5e
topology: v5e:2x2
jax: 0.10.0
libtpu: 0.0.40
codegen_flags: <defaults>
</compile_context>

<pallas_src>
import functools
from typing import NamedTuple

import jax
import jax.numpy as jnp
from jax.experimental import pallas as pl
from jax.experimental.pallas import tpu as pltpu


def _round_up(a: int, b: int) -> int:
    return (a + b - 1) // b * b


def _cdiv(a: int, b: int) -> int:
    return (a + b - 1) // b


@functools.lru_cache(maxsize=1)
def _chip_config():
    """Per-generation tiling / VMEM config, keyed off VMEM capacity.

    v5e/v6e (128 MiB VMEM, 1 TensorCore): a larger inter tile (tk=512) halves the number
      of full-width f32 accumulator read-modify-writes hitting the single vst slot.
    v7x (64 MiB VMEM per TensorCore, 2 TCs): keep tk=256, cap scoped VMEM well below the
      physical 64 MiB, single-buffer the k-resident blocks, and keep >=2 token tiles so
      the "parallel" axis can be sharded across both cores.
    """
    vmem_bytes = None
    try:
        vmem_bytes = int(pltpu.get_tpu_info().vmem_capacity_bytes)
    except Exception:
        vmem_bytes = None

    if vmem_bytes is None:
        # Unknown hardware: conservative, previously-known-good defaults.
        return dict(tk=256, vmem_limit=64 * 1024 * 1024,
                    single_buffer_resident=False, min_token_tiles=1)
    if vmem_bytes <= 96 * 1024 * 1024:
        # v7x-class chip.
        return dict(tk=256, vmem_limit=48 * 1024 * 1024,
                    single_buffer_resident=True, min_token_tiles=2)
    # v5e / v6e class chip.
    return dict(tk=512, vmem_limit=100 * 1024 * 1024,
                single_buffer_resident=False, min_token_tiles=1)


class ExpertWeights(NamedTuple):
    """Kernel-ready expert weights ((in, out) layout, inter_dim padded to a tile multiple)."""
    w1t: jax.Array   # (dim, inter_p)   bf16
    w3t: jax.Array   # (dim, inter_p)   bf16
    w2t: jax.Array   # (inter_p, dim)   bf16
    tk: int          # inter tile width; inter_p % tk == 0


def prepare_expert_weights(w1, w2, w3) -> ExpertWeights:
    """ONE-TIME (load-time) weight preprocessing — do NOT call per forward pass.

    Transposes the PyTorch (out_features, in_features) weights to (in, out) layout and
    zero-pads inter_dim to a lane-aligned tile multiple. Padded columns/rows are zero and
    contribute nothing to the output.
    """
    cfg = _chip_config()
    inter_dim, dim = w1.shape
    assert w3.shape == (inter_dim, dim), "w3 must match w1 layout (inter_dim, dim)"
    assert w2.shape == (dim, inter_dim), "w2 must be (dim, inter_dim)"

    tk = min(cfg["tk"], _round_up(inter_dim, 128))   # lane-aligned tile width
    inter_p = _round_up(inter_dim, tk)

    w1t = jnp.asarray(w1).T   # (dim, inter_dim)
    w3t = jnp.asarray(w3).T   # (dim, inter_dim)
    w2t = jnp.asarray(w2).T   # (inter_dim, dim)
    if inter_p != inter_dim:
        pad = inter_p - inter_dim
        w1t = jnp.pad(w1t, ((0, 0), (0, pad)))
        w3t = jnp.pad(w3t, ((0, 0), (0, pad)))
        w2t = jnp.pad(w2t, ((0, pad), (0, 0)))
    return ExpertWeights(w1t=w1t, w3t=w3t, w2t=w2t, tk=tk)


def _expert_kernel(x_ref, w1_ref, w3_ref, w2_ref, o_ref, acc_ref):
    # x_ref:   (tm, dim)  bf16   token tile, resident across the k (inter) axis
    # w1_ref:  (dim, tk)  bf16   w1^T tile k
    # w3_ref:  (dim, tk)  bf16   w3^T tile k
    # w2_ref:  (tk, dim)  bf16   w2^T rows for tile k
    # o_ref:   (tm, dim)  bf16   same block for every k -> resident output
    # acc_ref: (tm, dim)  f32    VMEM accumulator scratch
    k = pl.program_id(1)

    x = x_ref[...]
    # Two separate MXU passes (same MAC count as a fused [w1|w3] dot, but the f32 results
    # stay at (tm, tk) each — no (tm, 2*tk) spill and no h1/h3 slice copies).
    h1 = jnp.dot(x, w1_ref[...], preferred_element_type=jnp.float32)
    h3 = jnp.dot(x, w3_ref[...], preferred_element_type=jnp.float32)

    # silu(h1) * h3 in f32, cast once to bf16 for the bf16 second matmul.
    gated = ((h1 * jax.nn.sigmoid(h1)) * h3).astype(jnp.bfloat16)
    partial = jnp.dot(gated, w2_ref[...], preferred_element_type=jnp.float32)

    @pl.when(k == 0)
    def _init():
        acc_ref[...] = partial            # direct assign: saves a full zero store + reload

    @pl.when(k > 0)
    def _accum():
        acc_ref[...] += partial

    @pl.when(k == pl.num_programs(1) - 1)
    def _finalize():
        o_ref[...] = acc_ref[...].astype(o_ref.dtype)


def expert_forward(x, weights: ExpertWeights, *, tm: int = 256):
    """x: (..., dim) bf16.  `weights` must come from prepare_expert_weights (load-time)."""
    cfg = _chip_config()
    orig_shape = x.shape
    dim = orig_shape[-1]

    w1t, w3t, w2t, tk = weights
    inter_p = w1t.shape[1]
    nk = inter_p // tk

    x2d = x.reshape(-1, dim)
    tokens = x2d.shape[0]

    # ---- token tiling: balanced tiles (minimal zero padding), multiple of 16 for bf16
    # sublane packing; on 2-TC chips keep >= min_token_tiles so the parallel axis shards.
    n_tiles = _cdiv(tokens, tm)
    if tokens >= 32:
        n_tiles = max(n_tiles, cfg["min_token_tiles"])
    tm_eff = _round_up(_cdiv(tokens, n_tiles), 16)
    tokens_p = _round_up(tokens, tm_eff)
    if tokens_p != tokens:
        x2d = jnp.pad(x2d, ((0, tokens_p - tokens), (0, 0)))
    grid_m = tokens_p // tm_eff

    # x / output blocks are resident across k; single-buffer them on small-VMEM chips.
    if cfg["single_buffer_resident"]:
        x_spec = pl.BlockSpec((tm_eff, dim), lambda i, k: (i, 0),
                              pipeline_mode=pl.Buffered(1))
        out_spec = pl.BlockSpec((tm_eff, dim), lambda i, k: (i, 0),
                                pipeline_mode=pl.Buffered(1))
    else:
        x_spec = pl.BlockSpec((tm_eff, dim), lambda i, k: (i, 0))
        out_spec = pl.BlockSpec((tm_eff, dim), lambda i, k: (i, 0))

    w1_spec = pl.BlockSpec((dim, tk), lambda i, k: (0, k))
    w3_spec = pl.BlockSpec((dim, tk), lambda i, k: (0, k))
    w2_spec = pl.BlockSpec((tk, dim), lambda i, k: (k, 0))

    # Cost estimate: 3 matmuls; weights are re-streamed once per token tile.
    itemsize = x2d.dtype.itemsize
    flops = 6 * tokens_p * dim * inter_p
    weight_bytes = (w1t.size + w3t.size + w2t.size) * w1t.dtype.itemsize
    bytes_accessed = (x2d.size + tokens_p * dim) * itemsize + weight_bytes * grid_m

    cp_kwargs = dict(dimension_semantics=("parallel", "arbitrary"))
    if cfg["vmem_limit"] is not None:
        cp_kwargs["vmem_limit_bytes"] = cfg["vmem_limit"]

    out = pl.pallas_call(
        _expert_kernel,
        out_shape=jax.ShapeDtypeStruct((tokens_p, dim), x.dtype),
        grid_spec=pltpu.PrefetchScalarGridSpec(
            num_scalar_prefetch=0,
            grid=(grid_m, nk),
            in_specs=[x_spec, w1_spec, w3_spec, w2_spec],
            out_specs=out_spec,
            scratch_shapes=[pltpu.VMEM((tm_eff, dim), jnp.float32)],   # f32 accumulator
        ),
        compiler_params=pltpu.CompilerParams(**cp_kwargs),
        cost_estimate=pl.CostEstimate(
            flops=flops,
            transcendentals=tokens_p * inter_p,
            bytes_accessed=bytes_accessed,
        ),
    )(x2d, w1t, w3t, w2t)

    if tokens_p != tokens:
        out = out[:tokens]
    return out.reshape(orig_shape)


def _reference(x, w1, w2, w3):
    # Pure-JAX reference: bf16 weights/inputs, f32 accumulation, f32 silu/mul,
    # single bf16 cast of the gated activation, bf16 output (mirrors the kernel's chain).
    x2d = x.reshape(-1, x.shape[-1]).astype(jnp.float32)
    h1 = x2d @ w1.T.astype(jnp.float32)
    h3 = x2d @ w3.T.astype(jnp.float32)
    g = (h1 * jax.nn.sigmoid(h1)) * h3
    g = g.astype(jnp.bfloat16).astype(jnp.float32)
    y = (g @ w2.T.astype(jnp.float32)).astype(jnp.bfloat16)
    return y.reshape(x.shape)


if __name__ == "__main__":
    # Small shapes consistent with the module: tokens = batch*seq, feature dim, hidden.
    batch, seq = 2, 8
    dim, inter_dim = 32, 64

    key = jax.random.PRNGKey(0)
    kx, k1, k2, k3 = jax.random.split(key, 4)

    x = jax.random.normal(kx, (batch, seq, dim), dtype=jnp.float32).astype(jnp.bfloat16)
    # Deterministic parameter init (PyTorch layout: (out_features, in_features)), bf16.
    w1 = (jax.random.normal(k1, (inter_dim, dim), dtype=jnp.float32) / jnp.sqrt(dim)).astype(jnp.bfloat16)
    w2 = (jax.random.normal(k2, (dim, inter_dim), dtype=jnp.float32) / jnp.sqrt(inter_dim)).astype(jnp.bfloat16)
    w3 = (jax.random.normal(k3, (inter_dim, dim), dtype=jnp.float32) / jnp.sqrt(dim)).astype(jnp.bfloat16)

    # Load-time weight preparation (hoisted out of the forward path).
    params = prepare_expert_weights(w1, w2, w3)
    params = jax.tree_util.tree_map(
        lambda a: jax.block_until_ready(a) if isinstance(a, jax.Array) else a, params)

    y = expert_forward(x, params)
    y = jax.block_until_ready(y)

    y_ref = _reference(x, w1, w2, w3)
    err = jnp.max(jnp.abs(y.astype(jnp.float32) - y_ref.astype(jnp.float32)))
    assert err < 1e-1, f"mismatch vs reference: max abs err {err}"

    print("KERNEL_OK")
</pallas_src>

<mosaic_0001>
module attributes {stable_mosaic.version = 11 : i64} {
  func.func @_expert_kernel(%arg0: i32, %arg1: i32, %arg2: memref<16x32xbf16, #tpu.memory_space<vmem>>, %arg3: memref<32x128xbf16, #tpu.memory_space<vmem>>, %arg4: memref<32x128xbf16, #tpu.memory_space<vmem>>, %arg5: memref<128x32xbf16, #tpu.memory_space<vmem>>, %arg6: memref<16x32xbf16, #tpu.memory_space<vmem>>, %arg7: memref<16x32xf32, #tpu.memory_space<vmem>>) attributes {dimension_semantics = [#tpu.dimension_semantics<parallel>, #tpu.dimension_semantics<arbitrary>], iteration_bounds = array<i64: 1, 1>, scalar_prefetch = 0 : i64, scratch_operands = 1 : i64, tpu.core_type = #tpu.core_type<tc>, window_params = [{transform_indices = @transform_0, window_bounds = array<i64: 16, 32>}, {transform_indices = @transform_1, window_bounds = array<i64: 32, 128>}, {transform_indices = @transform_2, window_bounds = array<i64: 32, 128>}, {transform_indices = @transform_3, window_bounds = array<i64: 128, 32>}, {transform_indices = @transform_4, window_bounds = array<i64: 16, 32>}]} {
    %c0 = arith.constant 0 : index
    %c0_0 = arith.constant 0 : index
    %0 = vector.load %arg2[%c0, %c0_0] : memref<16x32xbf16, #tpu.memory_space<vmem>>, vector<16x32xbf16>
    %c0_1 = arith.constant 0 : index
    %c0_2 = arith.constant 0 : index
    %1 = vector.load %arg3[%c0_1, %c0_2] : memref<32x128xbf16, #tpu.memory_space<vmem>>, vector<32x128xbf16>
    %cst = arith.constant dense<0.000000e+00> : vector<16x128xf32>
    %2 = tpu.matmul %0, %1, %cst {dimension_numbers = #tpu.dot_dimension_numbers<[1], [0], [0], [1], [0, 0, 1, 1], [], []>} : vector<16x32xbf16>, vector<32x128xbf16>, vector<16x128xf32> -> vector<16x128xf32>
    %c0_3 = arith.constant 0 : index
    %c0_4 = arith.constant 0 : index
    %3 = vector.load %arg4[%c0_3, %c0_4] : memref<32x128xbf16, #tpu.memory_space<vmem>>, vector<32x128xbf16>
    %cst_5 = arith.constant dense<0.000000e+00> : vector<16x128xf32>
    %4 = tpu.matmul %0, %3, %cst_5 {dimension_numbers = #tpu.dot_dimension_numbers<[1], [0], [0], [1], [0, 0, 1, 1], [], []>} : vector<16x32xbf16>, vector<32x128xbf16>, vector<16x128xf32> -> vector<16x128xf32>
    %5 = arith.negf %2 : vector<16x128xf32>
    %6 = math.exp %5 : vector<16x128xf32>
    %cst_6 = arith.constant 1.000000e+00 : f32
    %7 = vector.broadcast %cst_6 : f32 to vector<16x128xf32>
    %8 = arith.addf %7, %6 : vector<16x128xf32>
    %9 = arith.divf %7, %8 : vector<16x128xf32>
    %10 = arith.mulf %2, %9 : vector<16x128xf32>
    %11 = arith.mulf %10, %4 : vector<16x128xf32>
    %12 = arith.truncf %11 : vector<16x128xf32> to vector<16x128xbf16>
    %c0_7 = arith.constant 0 : index
    %c0_8 = arith.constant 0 : index
    %13 = vector.load %arg5[%c0_7, %c0_8] : memref<128x32xbf16, #tpu.memory_space<vmem>>, vector<128x32xbf16>
    %cst_9 = arith.constant dense<0.000000e+00> : vector<16x32xf32>
    %14 = tpu.matmul %12, %13, %cst_9 {dimension_numbers = #tpu.dot_dimension_numbers<[1], [0], [0], [1], [0, 0, 1, 1], [], []>} : vector<16x128xbf16>, vector<128x32xbf16>, vector<16x32xf32> -> vector<16x32xf32>
    %c0_i32 = arith.constant 0 : i32
    %15 = arith.cmpi eq, %arg1, %c0_i32 : i32
    %16 = arith.extui %15 : i1 to i32
    %c0_i32_10 = arith.constant 0 : i32
    %17 = arith.cmpi ne, %16, %c0_i32_10 : i32
    scf.if %17 {
      %c0_15 = arith.constant 0 : index
      %c0_16 = arith.constant 0 : index
      %24 = vector.load %arg7[%c0_15, %c0_16] : memref<16x32xf32, #tpu.memory_space<vmem>>, vector<16x32xf32>
      tpu.vector_store %arg7[%c0_15, %c0_16], %14 {strides = array<i32>} : memref<16x32xf32, #tpu.memory_space<vmem>>, vector<16x32xf32>,
    } else {
    }
    %c0_i32_11 = arith.constant 0 : i32
    %18 = arith.cmpi sgt, %arg1, %c0_i32_11 : i32
    %19 = arith.extui %18 : i1 to i32
    %c0_i32_12 = arith.constant 0 : i32
    %20 = arith.cmpi ne, %19, %c0_i32_12 : i32
    scf.if %20 {
      %c0_15 = arith.constant 0 : index
      %c0_16 = arith.constant 0 : index
      %24 = vector.load %arg7[%c0_15, %c0_16] : memref<16x32xf32, #tpu.memory_space<vmem>>, vector<16x32xf32>
      %25 = arith.addf %24, %14 : vector<16x32xf32>
      %c0_17 = arith.constant 0 : index
      %c0_18 = arith.constant 0 : index
      %26 = vector.load %arg7[%c0_17, %c0_18] : memref<16x32xf32, #tpu.memory_space<vmem>>, vector<16x32xf32>
      tpu.vector_store %arg7[%c0_17, %c0_18], %25 {strides = array<i32>} : memref<16x32xf32, #tpu.memory_space<vmem>>, vector<16x32xf32>,
    } else {
    }
    %c0_i32_13 = arith.constant 0 : i32
    %21 = arith.cmpi eq, %arg1, %c0_i32_13 : i32
    %22 = arith.extui %21 : i1 to i32
    %c0_i32_14 = arith.constant 0 : i32
    %23 = arith.cmpi ne, %22, %c0_i32_14 : i32
    scf.if %23 {
      %c0_15 = arith.constant 0 : index
      %c0_16 = arith.constant 0 : index
      %24 = vector.load %arg7[%c0_15, %c0_16] : memref<16x32xf32, #tpu.memory_space<vmem>>, vector<16x32xf32>
      %25 = arith.truncf %24 : vector<16x32xf32> to vector<16x32xbf16>
      %c0_17 = arith.constant 0 : index
      %c0_18 = arith.constant 0 : index
      %26 = vector.load %arg6[%c0_17, %c0_18] : memref<16x32xbf16, #tpu.memory_space<vmem>>, vector<16x32xbf16>
      tpu.vector_store %arg6[%c0_17, %c0_18], %25 {strides = array<i32>} : memref<16x32xbf16, #tpu.memory_space<vmem>>, vector<16x32xbf16>,
    } else {
    }
    return
  }
  func.func @transform_0(%arg0: i32, %arg1: i32) -> (i32, i32) {
    %c0_i32 = arith.constant 0 : i32
    %c0_i32_0 = arith.constant 0 : i32
    return %arg0, %c0_i32 : i32, i32
  }
  func.func @transform_1(%arg0: i32, %arg1: i32) -> (i32, i32) {
    %c0_i32 = arith.constant 0 : i32
    %c0_i32_0 = arith.constant 0 : i32
    return %c0_i32, %arg1 : i32, i32
  }
  func.func @transform_2(%arg0: i32, %arg1: i32) -> (i32, i32) {
    %c0_i32 = arith.constant 0 : i32
    %c0_i32_0 = arith.constant 0 : i32
    return %c0_i32, %arg1 : i32, i32
  }
  func.func @transform_3(%arg0: i32, %arg1: i32) -> (i32, i32) {
    %c0_i32 = arith.constant 0 : i32
    %c0_i32_0 = arith.constant 0 : i32
    return %arg1, %c0_i32 : i32, i32
  }
  func.func @transform_4(%arg0: i32, %arg1: i32) -> (i32, i32) {
    %c0_i32 = arith.constant 0 : i32
    %c0_i32_0 = arith.constant 0 : i32
    return %arg0, %c0_i32 : i32, i32
  }
}

</mosaic_0001>

<llo_original>
// kernel: tpu_custom_call.1
$region0: #{tpu_custom_call.1}
  #allocation0 [shape = 'u32[]', space=smem, size = 0x4, offset = 0x4, fixed_abs, tag = 'smem constant byte address 0x4 - core index']
  #allocation1 [shape = 'u32[72,128]{1,0:T(1,128)}', space=vmem, size = 0x9000, scoped, tag = 'internal scratch']
  #allocation2 [shape = 'f32[16,32]{1,0:T(8,128)}', space=vmem, size = 0x2000, scoped, tag = 'scratch operand']
  %s0 = inlined_call_operand.vmem [shape: bf16[16,32], index: 0, kind: input, shape index: {}]
  %s1 = inlined_call_operand.vmem [shape: bf16[32,128], index: 1, kind: input, shape index: {}]
  %s2 = inlined_call_operand.vmem [shape: bf16[32,128], index: 2, kind: input, shape index: {}]
  %s3 = inlined_call_operand.vmem [shape: bf16[128,32], index: 3, kind: input, shape index: {}]
  %s4 = inlined_call_operand.hbm [shape: bf16[16,32], index: 4, kind: output, shape index: {}]
  %s5 = sld [smem:[#allocation0]]
  $region38: #{tpu_custom_call.1} parent=0
    _
  %s7 = ssub.s32 1, %s5
  %s8 = scalar_select 0, %s7, %s5
  $region1: #{tpu_custom_call.1} parent=0
    #allocation3 [shape = 'u8[4096]{0}', space=vmem, size = 0x1000, scoped, tag = 'output window, operand 0, single buffered']
    #allocation4 [shape = 's32[1]{0}', space=sflag, size = 0x4, scoped, tag = 'scoped memory for tpu_custom_call.1']
    %9 = vsyncpa [#allocation4], 0
    // Predicated region
    $region2: #{tpu_custom_call.1} parent=1 // pred_check
      _
    $region3: #{tpu_custom_call.1} parent=1 // pred_check_branch
      %11 = sbr.rel (0) target = $region5
    $region4: #{tpu_custom_call.1} parent=1 // pred_region
      _
    $region5: #{tpu_custom_call.1} parent=1 // pred_fallthru
      _
    // Predicated region
    $region6: #{tpu_custom_call.1} parent=1 // pred_check
      _
    $region7: #{tpu_custom_call.1} parent=1 // pred_check_branch
      %13 = sbr.rel (0) target = $region9
    $region8: #{tpu_custom_call.1} parent=1 // pred_region
      _
    $region9: #{tpu_custom_call.1} parent=1 // pred_fallthru
      _
    // Predicated region
    $region10: #{tpu_custom_call.1} parent=1 // pred_check
      _
    $region11: #{tpu_custom_call.1} parent=1 // pred_check_branch
      %15 = sbr.rel (0) target = $region13
    $region12: #{tpu_custom_call.1} parent=1 // pred_region
      _
    $region13: #{tpu_custom_call.1} parent=1 // pred_fallthru
      _
    // Predicated region
    $region14: #{tpu_custom_call.1} parent=1 // pred_check
      _
    $region15: #{tpu_custom_call.1} parent=1 // pred_check_branch
      %17 = sbr.rel (0) target = $region17
    $region16: #{tpu_custom_call.1} parent=1 // pred_region
      _
    $region17: #{tpu_custom_call.1} parent=1 // pred_fallthru
      _
    %v19 = vld [vmem:[%s0] sm:$0xf]
    %v20 = vld [vmem:[%s0 + $0x4] sm:$0xf]
    %v21 = vld [vmem:[%s1] sm:$0xf]
    %v22 = vld [vmem:[%s1 + $0x4] sm:$0xf]
    %v23 = vld [vmem:[%s1 + $0x8] sm:$0xf]
    %v24 = vld [vmem:[%s1 + $0xc] sm:$0xf]
    %v27 = vunpack.c.l.b16 %v19
    %v28 = vunpack.c.l.b16 %v20
    %v29 = vpack.c.b16 %v28, %v27
    %v34 = vunpack.c.l.b16 %v21
    %v35 = vunpack.c.l.b16 %v22
    %v36 = vunpack.c.l.b16 %v23
    %v37 = vunpack.c.l.b16 %v24
    %v38 = vpack.c.b16 %v35, %v34
    %v39 = vpack.c.b16 %v37, %v36
    %vm42 = vcmask 261120
    %v44 = vsel %vm42, %v29, 0
    %46 = vmatpush.bf16.msra.mxu0 0
    %47 = vmatpush.bf16.msra.mxu0 0
    %48 = vmatpush.bf16.msra.mxu0 0
    %49 = vmatpush.bf16.msra.mxu0 0
    %50 = vmatpush.bf16.msra.mxu0 0
    %51 = vmatpush.bf16.msra.mxu0 0
    %52 = vmatpush.bf16.msra.mxu0 %v39
    %53 = vmatpush.bf16.msra.mxu0 %v38
    %54 = vmatmul.bf16.gmra.mxu0 %v44
    %v55 = vpop.f32.mrf.mxu0
    %v56 = vadd.f32 0.0, %v55
    %v57 = vpop.f32.mrf.mxu0
    %v58 = vadd.f32 0.0, %v57
    %59 = vdwg.mxu0
    %v60 = vld [vmem:[%s2] sm:$0xf]
    %v61 = vld [vmem:[%s2 + $0x4] sm:$0xf]
    %v62 = vld [vmem:[%s2 + $0x8] sm:$0xf]
    %v63 = vld [vmem:[%s2 + $0xc] sm:$0xf]
    %v68 = vunpack.c.l.b16 %v60
    %v69 = vunpack.c.l.b16 %v61
    %v70 = vunpack.c.l.b16 %v62
    %v71 = vunpack.c.l.b16 %v63
    %v72 = vpack.c.b16 %v69, %v68
    %v73 = vpack.c.b16 %v71, %v70
    %76 = vmatpush.bf16.msra.mxu0 0
    %77 = vmatpush.bf16.msra.mxu0 0
    %78 = vmatpush.bf16.msra.mxu0 0
    %79 = vmatpush.bf16.msra.mxu0 0
    %80 = vmatpush.bf16.msra.mxu0 0
    %81 = vmatpush.bf16.msra.mxu0 0
    %82 = vmatpush.bf16.msra.mxu0 %v73
    %83 = vmatpush.bf16.msra.mxu0 %v72
    %84 = vmatmul.bf16.gmra.mxu0 %v44
    %v85 = vpop.f32.mrf.mxu0
    %v86 = vadd.f32 0.0, %v85
    %v87 = vpop.f32.mrf.mxu0
    %v88 = vadd.f32 0.0, %v87
    %89 = vdwg.mxu0
    %v90 = vxor.u32 %v56, 2147483648
    %v91 = vxor.u32 %v58, 2147483648
    %v92 = vmul.f32 %v90, 1.442695
    %v93 = vpow.pop %v92
    %v94 = vmul.f32 %v91, 1.442695
    %v95 = vpow.pop %v94
    %v96 = vadd.f32 %v93, 1.0
    %v97 = vadd.f32 %v95, 1.0
    %v98 = vrcp.pop %v96
    %v99 = vmul.f32 %v96, %v98
    %v100 = vsub.f32 1.0, %v99
    %v101 = vmul.f32 %v98, %v100
    %v102 = vadd.f32 %v98, %v101
    %vm103 = vweird.f32 %v96
    %vm104 = vweird.f32 %v98
    %vm105 = vmor %vm103, %vm104
    %v106 = vsel %vm105, %v98, %v102
    %v107 = vand.u32 2147483647, %v96
    %vm108 = vcmp.eq.f32.partialorder %v107, 8.507059e+37
    %v109 = vand.u32 %v96, 2147483648
    %v110 = vor.u32 1.1754944e-38, %v109
    %v111 = vsel %vm108, %v110, %v106
    %v112 = vmul.f32 1.0, %v111
    %v113 = vrcp.pop %v97
    %v114 = vmul.f32 %v97, %v113
    %v115 = vsub.f32 1.0, %v114
    %v116 = vmul.f32 %v113, %v115
    %v117 = vadd.f32 %v113, %v116
    %vm118 = vweird.f32 %v97
    %vm119 = vweird.f32 %v113
    %vm120 = vmor %vm118, %vm119
    %v121 = vsel %vm120, %v113, %v117
    %v122 = vand.u32 2147483647, %v97
    %vm123 = vcmp.eq.f32.partialorder %v122, 8.507059e+37
    %v124 = vand.u32 %v97, 2147483648
    %v125 = vor.u32 1.1754944e-38, %v124
    %v126 = vsel %vm123, %v125, %v121
    %v127 = vmul.f32 1.0, %v126
    %v128 = vmul.f32 %v56, %v112
    %v129 = vmul.f32 %v58, %v127
    %v130 = vmul.f32 %v128, %v86
    %v131 = vmul.f32 %v129, %v88
    %v132 = vpack.c.bf16 %v131, %v130
    %v133 = vld [vmem:[%s3] sm:$0xf]
    %v134 = vld [vmem:[%s3 + $0x4] sm:$0xf]
    %v135 = vld [vmem:[%s3 + $0x8] sm:$0xf]
    %v136 = vld [vmem:[%s3 + $0xc] sm:$0xf]
    %v137 = vld [vmem:[%s3 + $0x10] sm:$0xf]
    %v138 = vld [vmem:[%s3 + $0x14] sm:$0xf]
    %v139 = vld [vmem:[%s3 + $0x18] sm:$0xf]
    %v140 = vld [vmem:[%s3 + $0x1c] sm:$0xf]
    %v141 = vld [vmem:[%s3 + $0x20] sm:$0xf]
    %v142 = vld [vmem:[%s3 + $0x24] sm:$0xf]
    %v143 = vld [vmem:[%s3 + $0x28] sm:$0xf]
    %v144 = vld [vmem:[%s3 + $0x2c] sm:$0xf]
    %v145 = vld [vmem:[%s3 + $0x30] sm:$0xf]
    %v146 = vld [vmem:[%s3 + $0x34] sm:$0xf]
    %v147 = vld [vmem:[%s3 + $0x38] sm:$0xf]
    %v148 = vld [vmem:[%s3 + $0x3c] sm:$0xf]
    %v165 = vunpack.c.l.b16 %v133
    %v166 = vunpack.c.l.b16 %v134
    %v167 = vunpack.c.l.b16 %v135
    %v168 = vunpack.c.l.b16 %v136
    %v169 = vunpack.c.l.b16 %v137
    %v170 = vunpack.c.l.b16 %v138
    %v171 = vunpack.c.l.b16 %v139
    %v172 = vunpack.c.l.b16 %v140
    %v173 = vunpack.c.l.b16 %v141
    %v174 = vunpack.c.l.b16 %v142
    %v175 = vunpack.c.l.b16 %v143
    %v176 = vunpack.c.l.b16 %v144
    %v177 = vunpack.c.l.b16 %v145
    %v178 = vunpack.c.l.b16 %v146
    %v179 = vunpack.c.l.b16 %v147
    %v180 = vunpack.c.l.b16 %v148
    %v181 = vpack.c.b16 %v166, %v165
    %v182 = vpack.c.b16 %v168, %v167
    %v183 = vpack.c.b16 %v170, %v169
    %v184 = vpack.c.b16 %v172, %v171
    %v185 = vpack.c.b16 %v174, %v173
    %v186 = vpack.c.b16 %v176, %v175
    %v187 = vpack.c.b16 %v178, %v177
    %v188 = vpack.c.b16 %v180, %v179
    %197 = vmatpush.bf16.msra.mxu0 %v188
    %198 = vmatpush.bf16.msra.mxu0 %v187
    %199 = vmatpush.bf16.msra.mxu0 %v186
    %200 = vmatpush.bf16.msra.mxu0 %v185
    %201 = vmatpush.bf16.msra.mxu0 %v184
    %202 = vmatpush.bf16.msra.mxu0 %v183
    %203 = vmatpush.bf16.msra.mxu0 %v182
    %204 = vmatpush.bf16.msra.mxu0 %v181
    %205 = vmatmul.bf16.gmra.mxu0 %v132
    %v206 = vpop.f32.mrf.mxu0
    %v207 = vadd.f32 0.0, %v206
    %v208 = vpop.f32.mrf.mxu0
    %v209 = vadd.f32 0.0, %v208
    %210 = vdwg.mxu0
    %p211 = scmp.eq.s32.totalorder 0, 0
    // Predicated region
    $region18: #{tpu_custom_call.1} parent=1 // pred_check
      %p212 = pneg %p211
    $region19: #{tpu_custom_call.1} parent=1 // pred_check_branch
      %214 = sbr.rel (%p212) target = $region21
    $region20: #{tpu_custom_call.1} parent=1 // pred_region
      %215 = vst.msk [vmem:[#allocation2] sm:$0xff] %vm42, %v207
      %216 = vst.msk [vmem:[#allocation2 + $0x8] sm:$0xff] %vm42, %v209
    $region21: #{tpu_custom_call.1} parent=1 // pred_fallthru
      _
    %p217 = scmp.gt.s32.totalorder 0, 0
    // Predicated region
    $region22: #{tpu_custom_call.1} parent=1 // pred_check
      %p218 = pneg %p217
    $region23: #{tpu_custom_call.1} parent=1 // pred_check_branch
      %220 = sbr.rel (%p218) target = $region25
    $region24: #{tpu_custom_call.1} parent=1 // pred_region
      %v221 = vld [vmem:[#allocation2] sm:$0xff]
      %v222 = vld [vmem:[#allocation2 + $0x8] sm:$0xff]
      %v223 = vadd.f32 %v221, %v207
      %v224 = vadd.f32 %v222, %v209
      %225 = vst.msk [vmem:[#allocation2] sm:$0xff] %vm42, %v223
      %226 = vst.msk [vmem:[#allocation2 + $0x8] sm:$0xff] %vm42, %v224
    $region25: #{tpu_custom_call.1} parent=1 // pred_fallthru
      _
    // Predicated region
    $region26: #{tpu_custom_call.1} parent=1 // pred_check
      %p227 = pneg %p211
    $region27: #{tpu_custom_call.1} parent=1 // pred_check_branch
      %229 = sbr.rel (%p227) target = $region29
    $region28: #{tpu_custom_call.1} parent=1 // pred_region
      %v230 = vld [vmem:[#allocation2] sm:$0xff]
      %v231 = vld [vmem:[#allocation2 + $0x8] sm:$0xff]
      %v232 = vpack.c.bf16 %v230, %v230
      %v233 = vpack.c.bf16 %v231, %v231
      %vm234 = vcmask 257024
      %235 = vst.msk [vmem:[#allocation3] sm:$0xf] %vm234, %v232
      %236 = vst.msk [vmem:[#allocation3 + $0x4] sm:$0xf] %vm234, %v233
    $region29: #{tpu_custom_call.1} parent=1 // pred_fallthru
      _
    // Predicated region
    $region30: #{tpu_custom_call.1} parent=1 // pred_check
      _
    $region31: #{tpu_custom_call.1} parent=1 // pred_check_branch
      %238 = sbr.rel (0) target = $region33
    $region32: #{tpu_custom_call.1} parent=1 // pred_region
      %240 = vsyncadd [#allocation4], 0
      %s241 = sshll.u32 [#allocation3], 4
      %s242 = int_to_ptr.vmem [resolvable:$true] %s241
      %s243 = sshll.u32 %s4, 4
      %s244 = int_to_ptr.hbm [resolvable:$true] %s243
      %249 = dma.vmem_to_hbm [thread:$0]  %s242, 128, %s244, [#allocation4], 64, 64, 4
    $region33: #{tpu_custom_call.1} parent=1 // pred_fallthru
      _
    // Predicated region
    $region34: #{tpu_custom_call.1} parent=1 // pred_check
      _
    $region35: #{tpu_custom_call.1} parent=1 // pred_check_branch
      %251 = sbr.rel (0) target = $region37
    $region36: #{tpu_custom_call.1} parent=1 // pred_region
      %253 = dma.done [#allocation4], 128
    $region37: #{tpu_custom_call.1} parent=1 // pred_fallthru
      _
    %254 = vsyncpa [#allocation4], 1

</llo_original>
